<compile_context>
chip_gen: v7x
topology: tpu7x:2x2x1
jax: 0.10.0
libtpu: 0.0.40
codegen_flags: <defaults>
</compile_context>

<pallas_src>
import jax
import jax.numpy as jnp
from jax.experimental import pallas as pl
from jax.experimental.pallas import tpu as pltpu


def _make_kernel(out_channels):
    def kernel(w_ref, img_ref, out_ref):
        # w_ref:   SMEM (N*3,) pre-normalized weights [r0,g0,b0, r1,g1,b1, ...]
        # img_ref: VMEM (1, 3, TS, 128) dense pixel tile of batch item n
        # out_ref: VMEM (1, out_channels, TS, 128)
        n = pl.program_id(0)
        rn = w_ref[3 * n + 0]
        gn = w_ref[3 * n + 1]
        bn = w_ref[3 * n + 2]

        r = img_ref[0, 0, :, :].astype(jnp.float32)
        g = img_ref[0, 1, :, :].astype(jnp.float32)
        b = img_ref[0, 2, :, :].astype(jnp.float32)
        gray = (rn * r + gn * g + bn * b).astype(out_ref.dtype)

        for c in range(out_channels):
            out_ref[0, c, :, :] = gray

    return kernel


def color_shift(image, weights, *, tile_rows=2048, is_repeat=True):
    """image: (N, 3, H, W); weights: (N, 3) per-sample RGB weights.

    Returns the weighted grayscale, repeated to 3 channels if `is_repeat`
    (matching ColorShift.forward given the same weights), else (N, 1, H, W).
    """
    N, C, H, W = image.shape
    assert C == 3, "ColorShift expects 3 input channels"
    P = H * W
    out_c = 3 if is_repeat else 1

    # Normalization hoisted to the wrapper: kernel only does mul/add per pixel.
    # (Slightly different rounding than dot-then-divide; fine at 1e-5 tolerance.)
    w = weights.astype(jnp.float32)
    w_flat = (w / (jnp.sum(w, axis=-1, keepdims=True) + jnp.float32(1e-6))).reshape(-1)

    x = image.reshape(N, 3, P)
    rem = P % 128
    if rem != 0:
        # TODO(synk): unaligned H*W needs a tiny pad (to the next 128 multiple) to
        # keep the lane-dense (rows, 128) layout; this costs one extra copy pass.
        x = jnp.pad(x, ((0, 0), (0, 0), (0, 128 - rem)))
    Pp = x.shape[-1]
    R = Pp // 128
    x = x.reshape(N, 3, R, 128)  # free reshape when no pad was needed

    if R <= tile_rows:
        TS = R                      # full-extent row block (allowed for any R)
        num_row_tiles = 1
    else:
        TS = max(8, (tile_rows // 8) * 8)   # multiple of 8; last block may be partial
        num_row_tiles = pl.cdiv(R, TS)

    out = pl.pallas_call(
        _make_kernel(out_c),
        out_shape=jax.ShapeDtypeStruct((N, out_c, R, 128), image.dtype),
        grid_spec=pltpu.PrefetchScalarGridSpec(
            num_scalar_prefetch=1,
            grid=(N, num_row_tiles),
            in_specs=[
                pl.BlockSpec((1, 3, TS, 128), lambda n, p, w: (n, 0, p, 0)),
            ],
            out_specs=pl.BlockSpec((1, out_c, TS, 128), lambda n, p, w: (n, 0, p, 0)),
        ),
        compiler_params=pltpu.CompilerParams(
            dimension_semantics=("parallel", "parallel"),
            # ~12 MiB of double-buffered blocks at the default tile; keep the
            # budget v7x-safe (64 MiB physical / 32 MiB default scoped VMEM).
            vmem_limit_bytes=32 * 1024 * 1024,
        ),
    )(w_flat, x)

    out = out.reshape(N, out_c, Pp)
    if Pp != P:
        out = out[:, :, :P]
    return out.reshape(N, out_c, H, W)


def make_uniform_weights(key, N, dtype=jnp.float32):
    """Deterministic equivalent of the module's 'uniform' weight_mode:
       r ~ U[0.199, 0.399), g ~ U[0.487, 0.687), b ~ U[0.014, 0.214)."""
    # TODO(synk): torch's RNG sequence is not reproducible in JAX; only the
    # distribution is matched (weights generated host-side, not in-kernel).
    kr, kg, kb = jax.random.split(key, 3)
    r_w = jax.random.uniform(kr, (N,), dtype=dtype, minval=0.199, maxval=0.399)
    g_w = jax.random.uniform(kg, (N,), dtype=dtype, minval=0.487, maxval=0.687)
    b_w = jax.random.uniform(kb, (N,), dtype=dtype, minval=0.014, maxval=0.214)
    return jnp.stack([r_w, g_w, b_w], axis=1)  # (N, 3)


def _reference(image, weights, is_repeat=True):
    r, g, b = image[:, 0], image[:, 1], image[:, 2]
    rw = weights[:, 0][:, None, None]
    gw = weights[:, 1][:, None, None]
    bw = weights[:, 2][:, None, None]
    gray = (rw * r + gw * g + bw * b) / (rw + gw + bw + 1e-6)
    gray = gray[:, None, :, :]
    return jnp.repeat(gray, 3, axis=1) if is_repeat else gray


if __name__ == "__main__":
    key = jax.random.PRNGKey(0)
    k1, k2, k3, k4, k5, k6 = jax.random.split(key, 6)

    # 1) Small canonical case (aligned: H*W = 256, single full-extent block).
    N, C, H, W = 2, 3, 16, 16
    image = jax.random.uniform(k1, (N, C, H, W), dtype=jnp.float32)
    weights = make_uniform_weights(k2, N)
    out = jax.block_until_ready(color_shift(image, weights))
    assert out.shape == (N, 3, H, W)
    assert jnp.allclose(out, _reference(image, weights), atol=1e-5, rtol=1e-5)

    # 2) Multi-tile grid with a partial last row-block (R=20 rows, TS=8).
    N2, H2, W2 = 2, 40, 64
    image2 = jax.random.uniform(k3, (N2, 3, H2, W2), dtype=jnp.float32)
    weights2 = make_uniform_weights(k4, N2)
    out2 = jax.block_until_ready(color_shift(image2, weights2, tile_rows=8))
    assert out2.shape == (N2, 3, H2, W2)
    assert jnp.allclose(out2, _reference(image2, weights2), atol=1e-5, rtol=1e-5)

    # 3) Unaligned H*W (pad-to-128 fallback path) + is_repeat=False output.
    N3, H3, W3 = 2, 12, 10
    image3 = jax.random.uniform(k5, (N3, 3, H3, W3), dtype=jnp.float32)
    weights3 = make_uniform_weights(k6, N3)
    out3 = jax.block_until_ready(color_shift(image3, weights3, is_repeat=False))
    assert out3.shape == (N3, 1, H3, W3)
    assert jnp.allclose(out3, _reference(image3, weights3, is_repeat=False),
                        atol=1e-5, rtol=1e-5)

    print("KERNEL_OK")
</pallas_src>

<mosaic_0001>
module attributes {stable_mosaic.version = 11 : i64} {
  func.func @kernel(%arg0: i32, %arg1: i32, %arg2: memref<6xf32, #tpu.memory_space<smem>>, %arg3: memref<1x3x2x128xf32, #tpu.memory_space<vmem>>, %arg4: memref<1x3x2x128xf32, #tpu.memory_space<vmem>>) attributes {dimension_semantics = [#tpu.dimension_semantics<parallel>, #tpu.dimension_semantics<parallel>], iteration_bounds = array<i64: 2, 1>, scalar_prefetch = 1 : i64, scratch_operands = 0 : i64, tpu.core_type = #tpu.core_type<tc>, window_params = [{transform_indices = @transform_0, window_bounds = array<i64: 1, 3, 2, 128>}, {transform_indices = @transform_1, window_bounds = array<i64: 1, 3, 2, 128>}]} {
    %c3_i32 = arith.constant 3 : i32
    %0 = arith.muli %c3_i32, %arg0 : i32
    %c0_i32 = arith.constant 0 : i32
    %1 = arith.addi %0, %c0_i32 : i32
    %2 = arith.index_cast %1 : i32 to index
    %3 = memref.load %arg2[%2] : memref<6xf32, #tpu.memory_space<smem>>
    %c3_i32_0 = arith.constant 3 : i32
    %4 = arith.muli %c3_i32_0, %arg0 : i32
    %c1_i32 = arith.constant 1 : i32
    %5 = arith.addi %4, %c1_i32 : i32
    %6 = arith.index_cast %5 : i32 to index
    %7 = memref.load %arg2[%6] : memref<6xf32, #tpu.memory_space<smem>>
    %c3_i32_1 = arith.constant 3 : i32
    %8 = arith.muli %c3_i32_1, %arg0 : i32
    %c2_i32 = arith.constant 2 : i32
    %9 = arith.addi %8, %c2_i32 : i32
    %10 = arith.index_cast %9 : i32 to index
    %11 = memref.load %arg2[%10] : memref<6xf32, #tpu.memory_space<smem>>
    %c0 = arith.constant 0 : index
    %c0_2 = arith.constant 0 : index
    %c0_3 = arith.constant 0 : index
    %c0_4 = arith.constant 0 : index
    %12 = vector.load %arg3[%c0, %c0_2, %c0_3, %c0_4] : memref<1x3x2x128xf32, #tpu.memory_space<vmem>>, vector<1x1x2x128xf32>
    %13 = vector.shape_cast %12 : vector<1x1x2x128xf32> to vector<2x128xf32>
    %c0_5 = arith.constant 0 : index
    %c1 = arith.constant 1 : index
    %c0_6 = arith.constant 0 : index
    %c0_7 = arith.constant 0 : index
    %14 = vector.load %arg3[%c0_5, %c1, %c0_6, %c0_7] : memref<1x3x2x128xf32, #tpu.memory_space<vmem>>, vector<1x1x2x128xf32>
    %15 = vector.shape_cast %14 : vector<1x1x2x128xf32> to vector<2x128xf32>
    %c0_8 = arith.constant 0 : index
    %c2 = arith.constant 2 : index
    %c0_9 = arith.constant 0 : index
    %c0_10 = arith.constant 0 : index
    %16 = vector.load %arg3[%c0_8, %c2, %c0_9, %c0_10] : memref<1x3x2x128xf32, #tpu.memory_space<vmem>>, vector<1x1x2x128xf32>
    %17 = vector.shape_cast %16 : vector<1x1x2x128xf32> to vector<2x128xf32>
    %18 = vector.broadcast %3 : f32 to vector<2x128xf32>
    %19 = arith.mulf %18, %13 : vector<2x128xf32>
    %20 = vector.broadcast %7 : f32 to vector<2x128xf32>
    %21 = arith.mulf %20, %15 : vector<2x128xf32>
    %22 = arith.addf %19, %21 : vector<2x128xf32>
    %23 = vector.broadcast %11 : f32 to vector<2x128xf32>
    %24 = arith.mulf %23, %17 : vector<2x128xf32>
    %25 = arith.addf %22, %24 : vector<2x128xf32>
    %c0_11 = arith.constant 0 : index
    %c0_12 = arith.constant 0 : index
    %c0_13 = arith.constant 0 : index
    %c0_14 = arith.constant 0 : index
    %26 = vector.load %arg4[%c0_11, %c0_12, %c0_13, %c0_14] : memref<1x3x2x128xf32, #tpu.memory_space<vmem>>, vector<1x1x2x128xf32>
    %27 = vector.shape_cast %26 : vector<1x1x2x128xf32> to vector<2x128xf32>
    %28 = vector.shape_cast %25 : vector<2x128xf32> to vector<1x1x2x128xf32>
    tpu.vector_store %arg4[%c0_11, %c0_12, %c0_13, %c0_14], %28 {strides = array<i32>} : memref<1x3x2x128xf32, #tpu.memory_space<vmem>>, vector<1x1x2x128xf32>,
    %c0_15 = arith.constant 0 : index
    %c1_16 = arith.constant 1 : index
    %c0_17 = arith.constant 0 : index
    %c0_18 = arith.constant 0 : index
    %29 = vector.load %arg4[%c0_15, %c1_16, %c0_17, %c0_18] : memref<1x3x2x128xf32, #tpu.memory_space<vmem>>, vector<1x1x2x128xf32>
    %30 = vector.shape_cast %29 : vector<1x1x2x128xf32> to vector<2x128xf32>
    %31 = vector.shape_cast %25 : vector<2x128xf32> to vector<1x1x2x128xf32>
    tpu.vector_store %arg4[%c0_15, %c1_16, %c0_17, %c0_18], %31 {strides = array<i32>} : memref<1x3x2x128xf32, #tpu.memory_space<vmem>>, vector<1x1x2x128xf32>,
    %c0_19 = arith.constant 0 : index
    %c2_20 = arith.constant 2 : index
    %c0_21 = arith.constant 0 : index
    %c0_22 = arith.constant 0 : index
    %32 = vector.load %arg4[%c0_19, %c2_20, %c0_21, %c0_22] : memref<1x3x2x128xf32, #tpu.memory_space<vmem>>, vector<1x1x2x128xf32>
    %33 = vector.shape_cast %32 : vector<1x1x2x128xf32> to vector<2x128xf32>
    %34 = vector.shape_cast %25 : vector<2x128xf32> to vector<1x1x2x128xf32>
    tpu.vector_store %arg4[%c0_19, %c2_20, %c0_21, %c0_22], %34 {strides = array<i32>} : memref<1x3x2x128xf32, #tpu.memory_space<vmem>>, vector<1x1x2x128xf32>,
    return
  }
  func.func @transform_0(%arg0: i32, %arg1: i32, %arg2: memref<6xf32, #tpu.memory_space<smem>>) -> (i32, i32, i32, i32) {
    %c0_i32 = arith.constant 0 : i32
    %c0_i32_0 = arith.constant 0 : i32
    %c0_i32_1 = arith.constant 0 : i32
    return %arg0, %c0_i32, %arg1, %c0_i32_0 : i32, i32, i32, i32
  }
  func.func @transform_1(%arg0: i32, %arg1: i32, %arg2: memref<6xf32, #tpu.memory_space<smem>>) -> (i32, i32, i32, i32) {
    %c0_i32 = arith.constant 0 : i32
    %c0_i32_0 = arith.constant 0 : i32
    %c0_i32_1 = arith.constant 0 : i32
    return %arg0, %c0_i32, %arg1, %c0_i32_0 : i32, i32, i32, i32
  }
}

</mosaic_0001>

<llo_original>
// kernel: tpu_custom_call.1
$region0: #{tpu_custom_call.1}
  #allocation0 [shape = 'u32[]', space=smem, size = 0x4, offset = 0x4, fixed_abs, tag = 'smem constant byte address 0x4 - core index']
  #allocation1 [shape = 'u32[144,128]{1,0:T(1,128)}', space=vmem, size = 0x12000, scoped, tag = 'internal scratch']
  #allocation2 [shape = 's32[1]{0}', space=sflag, size = 0x4, scoped, tag = 'scoped memory for tpu_custom_call.1']
  #allocation3 [shape = 'u8[512]{0}', space=smem, size = 0x200, scoped, tag = 'prefetched SMEM operand 0']
  %s0 = inlined_call_operand.hbm [shape: f32[6], index: 0, kind: input, shape index: {}]
  %s1 = inlined_call_operand.hbm [shape: f32[2,3,2,128], index: 1, kind: input, shape index: {}]
  %s2 = inlined_call_operand.hbm [shape: f32[2,3,2,128], index: 2, kind: output, shape index: {}]
  %s3 = sld [smem:[#allocation0]]
  $region41: #{tpu_custom_call.1} parent=0
    _
  %s5 = ssub.s32 1, %s3
  %s6 = scalar_select 0, %s5, %s3
  %8 = dma.hbm_to_smem %s0, 16, [#allocation3], [#allocation2]
  %9 = dma.done [#allocation2], 16
  %10 = sfence
  $region1: #{tpu_custom_call.1} parent=0
    #allocation4 [shape = 'u8[6144]{0}', space=vmem, size = 0x1800, scoped, tag = 'input window, operand 1']
    #allocation5 [shape = 's32[2]{0}', space=sflag, size = 0x8, scoped, tag = 'scoped memory for tpu_custom_call.1']
    #allocation6 [shape = 's32[2]{0}', space=sflag, size = 0x8, scoped, tag = 'scoped memory for tpu_custom_call.1']
    #allocation7 [shape = 'u8[6144]{0}', space=vmem, size = 0x1800, scoped, tag = 'output window, operand 0']
    %11 = vsyncpa [#allocation5], 0
    %s12 = scalar_lea.sflag [#allocation5], 1
    %13 = vsyncpa %s12, 0
    %14 = vsyncpa [#allocation6], 0
    %s15 = scalar_lea.sflag [#allocation6], 1
    %16 = vsyncpa %s15, 0
    loop: start=0, step=1, limit=4
    $region2: #{tpu_custom_call.1} parent=1 // loop_pre_header
      _
    $region3: #{tpu_custom_call.1} parent=1 // loop_header
      %s18 = sphi 0, %s22
      %p19 = scmp.ge.s32.totalorder %s18, 4
      %s25 = sphi 0, %s37
      %s26 = sphi 0, %s33
      %s27 = sphi 0, %s25
      %s28 = sphi 0, %s26
      %s29 = sphi 0, %s27
      %s30 = sphi 0, %s28
      %s42 = sphi 0, %s44
      %s45 = sphi 0, %s42
      %s46 = sphi 0, %s45
      %s62 = sphi 0, %s46
      %s70 = sphi 0, %s72
      %s73 = sphi 0, %s70
      %s74 = sphi 0, %s73
      %s90 = sphi 0, %s74
    $region4: #{tpu_custom_call.1} parent=1 // loop_header_branch
      %21 = sbr.rel (%p19) target = $region8
    $region5: #{tpu_custom_call.1} parent=1 // loop_body
      %s23 = ssub.s32 %s18, 1
      %s24 = ssub.s32 %s18, 2
      %s31 = sadd.s32 1, %s26
      %p32 = scmp.ge.s32.totalorder %s31, 1
      %s33 = scalar_select %p32, 0, %s31
      %s34 = sadd.s32 1, %s25
      %s35 = scalar_select %p32, %s34, %s25
      %p36 = scmp.ge.s32.totalorder %s35, 2
      %s37 = scalar_select %p36, 0, %s35
      %s38 = ssub.s32 %s25, %s37
      %s39 = ssub.s32 %s26, %s33
      %s40 = sor.u32 %s38, %s39
      %p41 = scmp.eq.s32.totalorder %s40, 0
      %s43 = sadd.s32 %s42, 1
      %s44 = scalar_select %p41, %s42, %s43
      %p47 = pneg %p41
      %p48 = scmp.eq.s32.totalorder %s18, 1
      %p49 = por %p47, %p48
      %p50 = scmp.ne.s32.totalorder %s42, %s45
      %p51 = scmp.eq.s32.totalorder %s18, 0
      %p52 = por %p50, %p51
      %p53 = scmp.ne.s32.totalorder %s42, %s45
      %p54 = scmp.eq.s32.totalorder %s23, 1
      %p55 = por %p53, %p54
      %p56 = scmp.ne.s32.totalorder %s45, %s46
      %p57 = scmp.eq.s32.totalorder %s23, 0
      %p58 = por %p56, %p57
      %p59 = scmp.ne.s32.totalorder %s45, %s46
      %p60 = scmp.eq.s32.totalorder %s24, 1
      %p61 = por %p59, %p60
      %p63 = scmp.ne.s32.totalorder %s46, %s62
      %p64 = scmp.eq.s32.totalorder %s24, 0
      %p65 = por %p63, %p64
      %s66 = ssub.s32 %s25, %s37
      %s67 = ssub.s32 %s26, %s33
      %s68 = sor.u32 %s66, %s67
      %p69 = scmp.eq.s32.totalorder %s68, 0
      %s71 = sadd.s32 %s70, 1
      %s72 = scalar_select %p69, %s70, %s71
      %p75 = pneg %p69
      %p76 = scmp.eq.s32.totalorder %s18, 1
      %p77 = por %p75, %p76
      %p78 = scmp.ne.s32.totalorder %s70, %s73
      %p79 = scmp.eq.s32.totalorder %s18, 0
      %p80 = por %p78, %p79
      %p81 = scmp.ne.s32.totalorder %s70, %s73
      %p82 = scmp.eq.s32.totalorder %s23, 1
      %p83 = por %p81, %p82
      %p84 = scmp.ne.s32.totalorder %s73, %s74
      %p85 = scmp.eq.s32.totalorder %s23, 0
      %p86 = por %p84, %p85
      %p87 = scmp.ne.s32.totalorder %s73, %s74
      %p88 = scmp.eq.s32.totalorder %s24, 1
      %p89 = por %p87, %p88
      %p91 = scmp.ne.s32.totalorder %s74, %s90
      %p92 = scmp.eq.s32.totalorder %s24, 0
      %p93 = por %p91, %p92
      %p94 = scmp.le.s32.totalorder 1, %s18
      %p95 = scmp.lt.s32.totalorder %s18, 3
      %p96 = pnand %p94, %p95
      %p97 = pneg %p96
      // Predicated region
      $region9: #{tpu_custom_call.1} parent=5 // pred_check
        _
      $region10: #{tpu_custom_call.1} parent=5 // pred_check_branch
        %99 = sbr.rel (%p96) target = $region12
      $region11: #{tpu_custom_call.1} parent=5 // pred_region
        %s100 = ssub.s32 %s18, 1
      $region12: #{tpu_custom_call.1} parent=5 // pred_fallthru
        _
      %p101 = scmp.lt.s32.totalorder %s18, 2
      // Predicated region
      $region13: #{tpu_custom_call.1} parent=5 // pred_check
        %p102 = pneg %p101
      $region14: #{tpu_custom_call.1} parent=5 // pred_check_branch
        %104 = sbr.rel (%p102) target = $region16
      $region15: #{tpu_custom_call.1} parent=5 // pred_region
        // Predicated region
        $region17: #{tpu_custom_call.1} parent=15 // pred_check
          %p105 = pneg %p52
        $region18: #{tpu_custom_call.1} parent=15 // pred_check_branch
          %107 = sbr.rel (%p105) target = $region20
        $region19: #{tpu_custom_call.1} parent=15 // pred_region
          %s108 = sand.u32 %s42, 1
          %s109 = scalar_lea.sflag [#allocation5], %s108
          %s110 = sand.u32 %s42, 1
          %s111 = smul.addr %s110, 6
          %s112 = scalar_lea.vmem [#allocation4], %s111
          %s114 = ssub.s32 96, 96
          %115 = vsyncadd %s109, %s114
          %s116 = smul.addr %s25, 3
          %s117 = sadd.s32 %s26, %s116
          %s118 = smul.addr %s117, 32
          %s119 = scalar_lea.hbm %s1, %s118
          %s120 = sshll.u32 %s112, 4
          %s121 = int_to_ptr.vmem [resolvable:$true] %s120
          %126 = dma.hbm_to_vmem [thread:$0]  %s119, 96, %s121, %s109, 32, 32, 2
        $region20: #{tpu_custom_call.1} parent=15 // pred_fallthru
          _
      $region16: #{tpu_custom_call.1} parent=5 // pred_fallthru
        _
      %p127 = scmp.le.s32.totalorder 1, %s18
      %p128 = scmp.lt.s32.totalorder %s18, 3
      %p129 = pnand %p127, %p128
      %p130 = pneg %p129
      // Predicated region
      $region21: #{tpu_custom_call.1} parent=5 // pred_check
        _
      $region22: #{tpu_custom_call.1} parent=5 // pred_check_branch
        %132 = sbr.rel (%p129) target = $region24
      $region23: #{tpu_custom_call.1} parent=5 // pred_region
        %s133 = ssub.s32 %s18, 1
        %s134 = sand.u32 %s45, 1
        %s135 = scalar_lea.sflag [#allocation5], %s134
        %s136 = sand.u32 %s45, 1
        %s137 = smul.addr %s136, 6
        %s138 = scalar_lea.vmem [#allocation4], %s137
        // Predicated region
        $region25: #{tpu_custom_call.1} parent=23 // pred_check
          %p139 = pneg %p58
        $region26: #{tpu_custom_call.1} parent=23 // pred_check_branch
          %141 = sbr.rel (%p139) target = $region28
        $region27: #{tpu_custom_call.1} parent=23 // pred_region
          %142 = dma.done %s135, 96
        $region28: #{tpu_custom_call.1} parent=23 // pred_fallthru
          _
        %s143 = sand.u32 %s45, 1
        %s144 = scalar_lea.sflag [#allocation5], %s143
        %s145 = sand.u32 %s45, 1
        %s146 = smul.addr %s145, 6
        %s147 = scalar_lea.vmem [#allocation4], %s146
        %p148 = pneg %p58
        %p149 = pneg %p55
        %p150 = pneg %p86
        %p151 = pneg %p83
        %s152 = sand.u32 %s73, 1
        %s153 = scalar_lea.sflag [#allocation6], %s152
        %s154 = sand.u32 %s73, 1
        %s155 = smul.addr %s154, 6
        %s156 = scalar_lea.vmem [#allocation7], %s155
        %s157 = smul.u32 %s27, 3
        %s158 = sld [smem:[#allocation3 + %s157]]
        %s159 = sadd.s32 %s157, 1
        %s160 = sld [smem:[#allocation3 + %s159]]
        %s161 = sadd.s32 %s157, 2
        %s162 = sld [smem:[#allocation3 + %s161]]
        %v163 = vld [vmem:[%s138] sm:$0x3]
        %s164 = scalar_lea.vmem %s138, 2 [#allocation4]
        %v165 = vld [vmem:[%s164] sm:$0x3]
        %s166 = scalar_lea.vmem %s138, 4 [#allocation4]
        %v167 = vld [vmem:[%s166] sm:$0x3]
        %v168 = vstv %s158
        %v169 = vmul.f32 %v168, %v163
        %v170 = vstv %s160
        %v171 = vmul.f32 %v170, %v165
        %v172 = vadd.f32 %v169, %v171
        %v173 = vstv %s162
        %v174 = vmul.f32 %v173, %v167
        %v175 = vadd.f32 %v172, %v174
        %176 = vst [vmem:[%s156] sm:$0x3] %v175
        %s177 = scalar_lea.vmem %s156, 2 [#allocation7]
        %178 = vst [vmem:[%s177] sm:$0x3] %v175
        %s179 = scalar_lea.vmem %s156, 4 [#allocation7]
        %180 = vst [vmem:[%s179] sm:$0x3] %v175
        %s181 = sand.u32 %s73, 1
        %s182 = scalar_lea.sflag [#allocation6], %s181
        %s183 = sand.u32 %s73, 1
        %s184 = smul.addr %s183, 6
        %s185 = scalar_lea.vmem [#allocation7], %s184
        // Predicated region
        $region29: #{tpu_custom_call.1} parent=23 // pred_check
          %p186 = pneg %p83
        $region30: #{tpu_custom_call.1} parent=23 // pred_check_branch
          %188 = sbr.rel (%p186) target = $region32
        $region31: #{tpu_custom_call.1} parent=23 // pred_region
          %s190 = ssub.s32 96, 96
          %191 = vsyncadd %s182, %s190
          %s192 = smul.addr %s27, 3
          %s193 = sadd.s32 %s28, %s192
          %s194 = smul.addr %s193, 32
          %s195 = scalar_lea.hbm %s2, %s194
          %s196 = sshll.u32 %s185, 4
          %s197 = int_to_ptr.vmem [resolvable:$true] %s196
          %202 = dma.vmem_to_hbm [thread:$0]  %s197, 96, %s195, %s182, 32, 32, 2
        $region32: #{tpu_custom_call.1} parent=23 // pred_fallthru
          _
      $region24: #{tpu_custom_call.1} parent=5 // pred_fallthru
        _
      %p203 = scmp.le.s32.totalorder 2, %s18
      // Predicated region
      $region33: #{tpu_custom_call.1} parent=5 // pred_check
        %p204 = pneg %p203
      $region34: #{tpu_custom_call.1} parent=5 // pred_check_branch
        %206 = sbr.rel (%p204) target = $region36
      $region35: #{tpu_custom_call.1} parent=5 // pred_region
        %s207 = ssub.s32 %s18, 2
        // Predicated region
        $region37: #{tpu_custom_call.1} parent=35 // pred_check
          %p208 = pneg %p89
        $region38: #{tpu_custom_call.1} parent=35 // pred_check_branch
          %210 = sbr.rel (%p208) target = $region40
        $region39: #{tpu_custom_call.1} parent=35 // pred_region
          %s211 = sand.u32 %s74, 1
          %s212 = scalar_lea.sflag [#allocation6], %s211
          %s213 = sand.u32 %s74, 1
          %s214 = smul.addr %s213, 6
          %s215 = scalar_lea.vmem [#allocation7], %s214
          %216 = dma.done %s212, 96
        $region40: #{tpu_custom_call.1} parent=35 // pred_fallthru
          _
      $region36: #{tpu_custom_call.1} parent=5 // pred_fallthru
        _
    $region6: #{tpu_custom_call.1} parent=1 // loop_footer
      %s22 = sadd.s32 1, %s18
    $region7: #{tpu_custom_call.1} parent=1 // loop_footer_branch
      %17 = sbr.rel target = $region3
    $region8: #{tpu_custom_call.1} parent=1 // loop_exit
      _
    %217 = vsyncpa [#allocation5], 1
    %s218 = scalar_lea.sflag [#allocation5], 1
    %219 = vsyncpa %s218, 1
    %220 = vsyncpa [#allocation6], 1
    %s221 = scalar_lea.sflag [#allocation6], 1
    %222 = vsyncpa %s221, 1

</llo_original>
